<compile_context>
chip_gen: v7x
topology: tpu7x:2x2x1
jax: 0.10.0
libtpu: 0.0.40
codegen_flags: <defaults>
</compile_context>

<pallas_src>
import jax
import jax.numpy as jnp
from jax.experimental import pallas as pl
from jax.experimental.pallas import tpu as pltpu

DIM_IN = 2
DIM_OUT = 2
DIM_HIDDEN = 128
NUM_LAYERS = 5
N_COND = 16          # noiser.training_timesteps (synthetic)
MAX_TB = 256         # batch tile for large batches (f32 activations)


def _cdiv(a, b):
    return (a + b - 1) // b


def _round_up(v, m):
    return _cdiv(v, m) * m


def resmlp_kernel(x_ref, emb_ref, w_in_ref, w_h_ref, b_h_ref,
                  w_out_t_ref, b_out_ref, o_ref):
    # Input projection: K=2 contraction as VPU multiply-adds (an MXU matmul with
    # K=2 would pad the contraction dim and burn a full MXU pass for ~1.5% work).
    # b_in is pre-folded into the embedding table in glue.
    x = x_ref[...]                                               # (TB, 2) f32
    h = (x[:, 0:1] * w_in_ref[0:1, :]
         + x[:, 1:2] * w_in_ref[1:2, :]
         + emb_ref[...])                                         # (TB, 128) f32
    h = h * jax.nn.sigmoid(h)                                    # silu (f32 VPU/EUP)

    # Residual hidden stack: 5 MXU passes per tile, bf16 operands, f32 accumulate.
    for l in range(NUM_LAYERS):
        z = jnp.dot(h.astype(jnp.bfloat16), w_h_ref[l],
                    preferred_element_type=jnp.float32) + b_h_ref[l:l + 1, :]
        h = h + z * jax.nn.sigmoid(z)

    # Output projection (N=2): VPU multiplies + XLU lane reductions, no MXU pass.
    y0 = jnp.sum(h * w_out_t_ref[0:1, :], axis=-1, keepdims=True)   # (TB, 1)
    y1 = jnp.sum(h * w_out_t_ref[1:2, :], axis=-1, keepdims=True)   # (TB, 1)
    o_ref[...] = jnp.concatenate([y0, y1], axis=-1) + b_out_ref[...]


def resmlp_forward(x, emb, prep):
    """x: (B, 2) f32, emb: (B, 128) f32 (b_in already folded in)."""
    B = x.shape[0]
    if B <= MAX_TB:
        # Single grid step: no per-step pipeline overhead, no megacore split of
        # a latency-bound tiny batch.
        n = 1
        tb = max(8, _round_up(B, 8))
    else:
        n = _cdiv(B, MAX_TB)
        if n % 2:
            n += 1            # even step count -> balanced 2-TC split on v7x
        tb = _round_up(_cdiv(B, n), 8)   # re-balance tile -> minimal padding
    b_pad = n * tb
    if b_pad != B:
        x = jnp.pad(x, ((0, b_pad - B), (0, 0)))
        emb = jnp.pad(emb, ((0, b_pad - B), (0, 0)))

    rep2 = lambda i: (0, 0)
    rep3 = lambda i: (0, 0, 0)
    out = pl.pallas_call(
        resmlp_kernel,
        out_shape=jax.ShapeDtypeStruct((b_pad, DIM_OUT), jnp.float32),
        grid_spec=pltpu.PrefetchScalarGridSpec(
            num_scalar_prefetch=0,
            grid=(n,),
            in_specs=[
                pl.BlockSpec((tb, DIM_IN), lambda i: (i, 0)),              # x
                pl.BlockSpec((tb, DIM_HIDDEN), lambda i: (i, 0)),          # emb(+b_in)
                pl.BlockSpec((DIM_IN, DIM_HIDDEN), rep2),                  # w_in  f32
                pl.BlockSpec((NUM_LAYERS, DIM_HIDDEN, DIM_HIDDEN), rep3),  # w_h   bf16
                pl.BlockSpec((NUM_LAYERS, DIM_HIDDEN), rep2),              # b_h   f32
                pl.BlockSpec((DIM_OUT, DIM_HIDDEN), rep2),                 # w_out^T f32
                pl.BlockSpec((1, DIM_OUT), rep2),                          # b_out f32
            ],
            out_specs=pl.BlockSpec((tb, DIM_OUT), lambda i: (i, 0)),
        ),
        compiler_params=pltpu.CompilerParams(
            dimension_semantics=("parallel",)),   # 2-TC sharding on v7x when n>1
    )(x, emb, prep["w_in"], prep["w_h"], prep["b_h"],
      prep["w_out_t"], prep["b_out"])
    return out[:B] if b_pad != B else out


def init_params(key):
    ks = jax.random.split(key, 8)
    s_in = 1.0 / jnp.sqrt(DIM_IN)
    s_h = 1.0 / jnp.sqrt(DIM_HIDDEN)
    return {
        "t_embed": 0.02 * jax.random.normal(ks[0], (N_COND, DIM_HIDDEN), jnp.float32),
        "w_in":  s_in * jax.random.normal(ks[1], (DIM_IN, DIM_HIDDEN), jnp.float32),
        "b_in":  jnp.zeros((1, DIM_HIDDEN), jnp.float32),
        "w_h":   s_h * jax.random.normal(ks[2], (NUM_LAYERS, DIM_HIDDEN, DIM_HIDDEN), jnp.float32),
        "b_h":   jnp.zeros((NUM_LAYERS, DIM_HIDDEN), jnp.float32),
        "w_out": s_h * jax.random.normal(ks[3], (DIM_HIDDEN, DIM_OUT), jnp.float32),
        "b_out": jnp.zeros((1, DIM_OUT), jnp.float32),
        # noiser.timestep_map (identity map over training timesteps, int32)
        "timestep_map": jnp.arange(N_COND, dtype=jnp.int32),
    }


def prepare_params(params):
    """One-time kernel-ready parameter prep (outside the per-call path)."""
    return {
        "timestep_map": params["timestep_map"],
        "emb_tab": params["t_embed"] + params["b_in"],            # b_in folded in, f32
        "w_in":    params["w_in"],                                 # f32 (VPU operand)
        "w_h":     params["w_h"].astype(jnp.bfloat16),             # bf16 MXU operand
        "b_h":     params["b_h"],                                  # f32
        "w_out_t": params["w_out"].T,                              # (2, 128) f32 (VPU operand)
        "b_out":   params["b_out"],                                # (1, 2) f32
    }


def base_model_forward(prep, x_t, t):
    """BaseModel.forward: t = noiser.timestep_map[t]; x = network(x_t, t)."""
    t_mapped = prep["timestep_map"][t]          # glue: integer lookup (clamping gather)
    emb = prep["emb_tab"][t_mapped]             # glue: (B, 128) embedding gather
    return resmlp_forward(x_t, emb, prep)


def base_model_forward_ref(params, x_t, t):
    """Pure-JAX reference with the same bf16-operand / f32-accumulate numerics."""
    t_mapped = params["timestep_map"][t]
    emb = params["t_embed"][t_mapped] + params["b_in"]
    h = x_t @ params["w_in"] + emb
    h = jax.nn.silu(h)
    w_h_bf16 = params["w_h"].astype(jnp.bfloat16)
    for l in range(NUM_LAYERS):
        z = jnp.dot(h.astype(jnp.bfloat16), w_h_bf16[l],
                    preferred_element_type=jnp.float32) + params["b_h"][l]
        h = h + jax.nn.silu(z)
    return h @ params["w_out"] + params["b_out"]


if __name__ == "__main__":
    key = jax.random.PRNGKey(0)
    k_p, k_x, k_t, k_x2, k_t2 = jax.random.split(key, 5)
    params = init_params(k_p)
    prep = prepare_params(params)

    fwd = jax.jit(base_model_forward)

    # Small (inference-size) batch: single grid step, no pad/slice glue.
    B = 16
    x_t = jax.random.normal(k_x, (B, DIM_IN), jnp.float32)     # (B, 2) points
    t = jax.random.randint(k_t, (B,), 0, N_COND, dtype=jnp.int32)

    out = fwd(prep, x_t, t)
    jax.block_until_ready(out)
    assert out.shape == (B, DIM_OUT) and out.dtype == jnp.float32
    ref = base_model_forward_ref(params, x_t, t)
    assert jnp.allclose(out, ref, rtol=2e-2, atol=2e-2), "mismatch vs reference (B=16)"

    # Larger batch: exercises the multi-step (even) grid / balanced-tile path.
    B2 = 272
    x_t2 = jax.random.normal(k_x2, (B2, DIM_IN), jnp.float32)
    t2 = jax.random.randint(k_t2, (B2,), 0, N_COND, dtype=jnp.int32)
    out2 = fwd(prep, x_t2, t2)
    jax.block_until_ready(out2)
    assert out2.shape == (B2, DIM_OUT)
    ref2 = base_model_forward_ref(params, x_t2, t2)
    assert jnp.allclose(out2, ref2, rtol=2e-2, atol=2e-2), "mismatch vs reference (B=272)"

    print("KERNEL_OK")
</pallas_src>

<mosaic_0001>
module attributes {stable_mosaic.version = 11 : i64} {
  func.func @resmlp_kernel(%arg0: i32, %arg1: memref<16x2xf32, #tpu.memory_space<vmem>>, %arg2: memref<16x128xf32, #tpu.memory_space<vmem>>, %arg3: memref<2x128xf32, #tpu.memory_space<vmem>>, %arg4: memref<5x128x128xbf16, #tpu.memory_space<vmem>>, %arg5: memref<5x128xf32, #tpu.memory_space<vmem>>, %arg6: memref<2x128xf32, #tpu.memory_space<vmem>>, %arg7: memref<1x2xf32, #tpu.memory_space<vmem>>, %arg8: memref<16x2xf32, #tpu.memory_space<vmem>>) attributes {dimension_semantics = [#tpu.dimension_semantics<parallel>], iteration_bounds = array<i64: 1>, scalar_prefetch = 0 : i64, scratch_operands = 0 : i64, tpu.core_type = #tpu.core_type<tc>, window_params = [{transform_indices = @transform_0, window_bounds = array<i64: 16, 2>}, {transform_indices = @transform_1, window_bounds = array<i64: 16, 128>}, {pipeline_mode = #tpu.pipeline_mode<synchronous>, transform_indices = @transform_2, window_bounds = array<i64: 2, 128>}, {pipeline_mode = #tpu.pipeline_mode<synchronous>, transform_indices = @transform_3, window_bounds = array<i64: 5, 128, 128>}, {pipeline_mode = #tpu.pipeline_mode<synchronous>, transform_indices = @transform_4, window_bounds = array<i64: 5, 128>}, {pipeline_mode = #tpu.pipeline_mode<synchronous>, transform_indices = @transform_5, window_bounds = array<i64: 2, 128>}, {pipeline_mode = #tpu.pipeline_mode<synchronous>, transform_indices = @transform_6, window_bounds = array<i64: 1, 2>}, {transform_indices = @transform_7, window_bounds = array<i64: 16, 2>}]} {
    %c0 = arith.constant 0 : index
    %c0_0 = arith.constant 0 : index
    %0 = vector.load %arg1[%c0, %c0_0] : memref<16x2xf32, #tpu.memory_space<vmem>>, vector<16x2xf32>
    %1 = vector.extract_strided_slice %0 {offsets = [0, 0], sizes = [16, 1], strides = [1, 1]} : vector<16x2xf32> to vector<16x1xf32>
    %c0_1 = arith.constant 0 : index
    %c0_2 = arith.constant 0 : index
    %2 = vector.load %arg3[%c0_1, %c0_2] : memref<2x128xf32, #tpu.memory_space<vmem>>, vector<1x128xf32>
    %3 = vector.broadcast %1 : vector<16x1xf32> to vector<16x128xf32>
    %4 = vector.broadcast %2 : vector<1x128xf32> to vector<16x128xf32>
    %5 = arith.mulf %3, %4 : vector<16x128xf32>
    %6 = vector.extract_strided_slice %0 {offsets = [0, 1], sizes = [16, 1], strides = [1, 1]} : vector<16x2xf32> to vector<16x1xf32>
    %c1 = arith.constant 1 : index
    %c0_3 = arith.constant 0 : index
    %7 = vector.load %arg3[%c1, %c0_3] : memref<2x128xf32, #tpu.memory_space<vmem>>, vector<1x128xf32>
    %8 = vector.broadcast %6 : vector<16x1xf32> to vector<16x128xf32>
    %9 = vector.broadcast %7 : vector<1x128xf32> to vector<16x128xf32>
    %10 = arith.mulf %8, %9 : vector<16x128xf32>
    %11 = arith.addf %5, %10 : vector<16x128xf32>
    %c0_4 = arith.constant 0 : index
    %c0_5 = arith.constant 0 : index
    %12 = vector.load %arg2[%c0_4, %c0_5] : memref<16x128xf32, #tpu.memory_space<vmem>>, vector<16x128xf32>
    %13 = arith.addf %11, %12 : vector<16x128xf32>
    %14 = arith.negf %13 : vector<16x128xf32>
    %15 = math.exp %14 : vector<16x128xf32>
    %cst = arith.constant 1.000000e+00 : f32
    %16 = vector.broadcast %cst : f32 to vector<16x128xf32>
    %17 = arith.addf %16, %15 : vector<16x128xf32>
    %18 = arith.divf %16, %17 : vector<16x128xf32>
    %19 = arith.mulf %13, %18 : vector<16x128xf32>
    %20 = arith.truncf %19 : vector<16x128xf32> to vector<16x128xbf16>
    %c0_6 = arith.constant 0 : index
    %c0_7 = arith.constant 0 : index
    %c0_8 = arith.constant 0 : index
    %21 = vector.load %arg4[%c0_6, %c0_7, %c0_8] : memref<5x128x128xbf16, #tpu.memory_space<vmem>>, vector<1x128x128xbf16>
    %22 = vector.shape_cast %21 : vector<1x128x128xbf16> to vector<128x128xbf16>
    %cst_9 = arith.constant dense<0.000000e+00> : vector<16x128xf32>
    %23 = tpu.matmul %20, %22, %cst_9 {dimension_numbers = #tpu.dot_dimension_numbers<[1], [0], [0], [1], [0, 0, 1, 1], [], []>} : vector<16x128xbf16>, vector<128x128xbf16>, vector<16x128xf32> -> vector<16x128xf32>
    %c0_10 = arith.constant 0 : index
    %c0_11 = arith.constant 0 : index
    %24 = vector.load %arg5[%c0_10, %c0_11] : memref<5x128xf32, #tpu.memory_space<vmem>>, vector<1x128xf32>
    %25 = vector.broadcast %24 : vector<1x128xf32> to vector<16x128xf32>
    %26 = arith.addf %23, %25 : vector<16x128xf32>
    %27 = arith.negf %26 : vector<16x128xf32>
    %28 = math.exp %27 : vector<16x128xf32>
    %cst_12 = arith.constant 1.000000e+00 : f32
    %29 = vector.broadcast %cst_12 : f32 to vector<16x128xf32>
    %30 = arith.addf %29, %28 : vector<16x128xf32>
    %31 = arith.divf %29, %30 : vector<16x128xf32>
    %32 = arith.mulf %26, %31 : vector<16x128xf32>
    %33 = arith.addf %19, %32 : vector<16x128xf32>
    %34 = arith.truncf %33 : vector<16x128xf32> to vector<16x128xbf16>
    %c1_13 = arith.constant 1 : index
    %c0_14 = arith.constant 0 : index
    %c0_15 = arith.constant 0 : index
    %35 = vector.load %arg4[%c1_13, %c0_14, %c0_15] : memref<5x128x128xbf16, #tpu.memory_space<vmem>>, vector<1x128x128xbf16>
    %36 = vector.shape_cast %35 : vector<1x128x128xbf16> to vector<128x128xbf16>
    %cst_16 = arith.constant dense<0.000000e+00> : vector<16x128xf32>
    %37 = tpu.matmul %34, %36, %cst_16 {dimension_numbers = #tpu.dot_dimension_numbers<[1], [0], [0], [1], [0, 0, 1, 1], [], []>} : vector<16x128xbf16>, vector<128x128xbf16>, vector<16x128xf32> -> vector<16x128xf32>
    %c1_17 = arith.constant 1 : index
    %c0_18 = arith.constant 0 : index
    %38 = vector.load %arg5[%c1_17, %c0_18] : memref<5x128xf32, #tpu.memory_space<vmem>>, vector<1x128xf32>
    %39 = vector.broadcast %38 : vector<1x128xf32> to vector<16x128xf32>
    %40 = arith.addf %37, %39 : vector<16x128xf32>
    %41 = arith.negf %40 : vector<16x128xf32>
    %42 = math.exp %41 : vector<16x128xf32>
    %cst_19 = arith.constant 1.000000e+00 : f32
    %43 = vector.broadcast %cst_19 : f32 to vector<16x128xf32>
    %44 = arith.addf %43, %42 : vector<16x128xf32>
    %45 = arith.divf %43, %44 : vector<16x128xf32>
    %46 = arith.mulf %40, %45 : vector<16x128xf32>
    %47 = arith.addf %33, %46 : vector<16x128xf32>
    %48 = arith.truncf %47 : vector<16x128xf32> to vector<16x128xbf16>
    %c2 = arith.constant 2 : index
    %c0_20 = arith.constant 0 : index
    %c0_21 = arith.constant 0 : index
    %49 = vector.load %arg4[%c2, %c0_20, %c0_21] : memref<5x128x128xbf16, #tpu.memory_space<vmem>>, vector<1x128x128xbf16>
    %50 = vector.shape_cast %49 : vector<1x128x128xbf16> to vector<128x128xbf16>
    %cst_22 = arith.constant dense<0.000000e+00> : vector<16x128xf32>
    %51 = tpu.matmul %48, %50, %cst_22 {dimension_numbers = #tpu.dot_dimension_numbers<[1], [0], [0], [1], [0, 0, 1, 1], [], []>} : vector<16x128xbf16>, vector<128x128xbf16>, vector<16x128xf32> -> vector<16x128xf32>
    %c2_23 = arith.constant 2 : index
    %c0_24 = arith.constant 0 : index
    %52 = vector.load %arg5[%c2_23, %c0_24] : memref<5x128xf32, #tpu.memory_space<vmem>>, vector<1x128xf32>
    %53 = vector.broadcast %52 : vector<1x128xf32> to vector<16x128xf32>
    %54 = arith.addf %51, %53 : vector<16x128xf32>
    %55 = arith.negf %54 : vector<16x128xf32>
    %56 = math.exp %55 : vector<16x128xf32>
    %cst_25 = arith.constant 1.000000e+00 : f32
    %57 = vector.broadcast %cst_25 : f32 to vector<16x128xf32>
    %58 = arith.addf %57, %56 : vector<16x128xf32>
    %59 = arith.divf %57, %58 : vector<16x128xf32>
    %60 = arith.mulf %54, %59 : vector<16x128xf32>
    %61 = arith.addf %47, %60 : vector<16x128xf32>
    %62 = arith.truncf %61 : vector<16x128xf32> to vector<16x128xbf16>
    %c3 = arith.constant 3 : index
    %c0_26 = arith.constant 0 : index
    %c0_27 = arith.constant 0 : index
    %63 = vector.load %arg4[%c3, %c0_26, %c0_27] : memref<5x128x128xbf16, #tpu.memory_space<vmem>>, vector<1x128x128xbf16>
    %64 = vector.shape_cast %63 : vector<1x128x128xbf16> to vector<128x128xbf16>
    %cst_28 = arith.constant dense<0.000000e+00> : vector<16x128xf32>
    %65 = tpu.matmul %62, %64, %cst_28 {dimension_numbers = #tpu.dot_dimension_numbers<[1], [0], [0], [1], [0, 0, 1, 1], [], []>} : vector<16x128xbf16>, vector<128x128xbf16>, vector<16x128xf32> -> vector<16x128xf32>
    %c3_29 = arith.constant 3 : index
    %c0_30 = arith.constant 0 : index
    %66 = vector.load %arg5[%c3_29, %c0_30] : memref<5x128xf32, #tpu.memory_space<vmem>>, vector<1x128xf32>
    %67 = vector.broadcast %66 : vector<1x128xf32> to vector<16x128xf32>
    %68 = arith.addf %65, %67 : vector<16x128xf32>
    %69 = arith.negf %68 : vector<16x128xf32>
    %70 = math.exp %69 : vector<16x128xf32>
    %cst_31 = arith.constant 1.000000e+00 : f32
    %71 = vector.broadcast %cst_31 : f32 to vector<16x128xf32>
    %72 = arith.addf %71, %70 : vector<16x128xf32>
    %73 = arith.divf %71, %72 : vector<16x128xf32>
    %74 = arith.mulf %68, %73 : vector<16x128xf32>
    %75 = arith.addf %61, %74 : vector<16x128xf32>
    %76 = arith.truncf %75 : vector<16x128xf32> to vector<16x128xbf16>
    %c4 = arith.constant 4 : index
    %c0_32 = arith.constant 0 : index
    %c0_33 = arith.constant 0 : index
    %77 = vector.load %arg4[%c4, %c0_32, %c0_33] : memref<5x128x128xbf16, #tpu.memory_space<vmem>>, vector<1x128x128xbf16>
    %78 = vector.shape_cast %77 : vector<1x128x128xbf16> to vector<128x128xbf16>
    %cst_34 = arith.constant dense<0.000000e+00> : vector<16x128xf32>
    %79 = tpu.matmul %76, %78, %cst_34 {dimension_numbers = #tpu.dot_dimension_numbers<[1], [0], [0], [1], [0, 0, 1, 1], [], []>} : vector<16x128xbf16>, vector<128x128xbf16>, vector<16x128xf32> -> vector<16x128xf32>
    %c4_35 = arith.constant 4 : index
    %c0_36 = arith.constant 0 : index
    %80 = vector.load %arg5[%c4_35, %c0_36] : memref<5x128xf32, #tpu.memory_space<vmem>>, vector<1x128xf32>
    %81 = vector.broadcast %80 : vector<1x128xf32> to vector<16x128xf32>
    %82 = arith.addf %79, %81 : vector<16x128xf32>
    %83 = arith.negf %82 : vector<16x128xf32>
    %84 = math.exp %83 : vector<16x128xf32>
    %cst_37 = arith.constant 1.000000e+00 : f32
    %85 = vector.broadcast %cst_37 : f32 to vector<16x128xf32>
    %86 = arith.addf %85, %84 : vector<16x128xf32>
    %87 = arith.divf %85, %86 : vector<16x128xf32>
    %88 = arith.mulf %82, %87 : vector<16x128xf32>
    %89 = arith.addf %75, %88 : vector<16x128xf32>
    %c0_38 = arith.constant 0 : index
    %c0_39 = arith.constant 0 : index
    %90 = vector.load %arg6[%c0_38, %c0_39] : memref<2x128xf32, #tpu.memory_space<vmem>>, vector<1x128xf32>
    %91 = vector.broadcast %90 : vector<1x128xf32> to vector<16x128xf32>
    %92 = arith.mulf %89, %91 : vector<16x128xf32>
    %cst_40 = arith.constant dense<0.000000e+00> : vector<16xf32>
    %93 = vector.multi_reduction <add>, %92, %cst_40 [1] : vector<16x128xf32> to vector<16xf32>
    %94 = vector.shape_cast %93 : vector<16xf32> to vector<16x1xf32>
    %c1_41 = arith.constant 1 : index
    %c0_42 = arith.constant 0 : index
    %95 = vector.load %arg6[%c1_41, %c0_42] : memref<2x128xf32, #tpu.memory_space<vmem>>, vector<1x128xf32>
    %96 = vector.broadcast %95 : vector<1x128xf32> to vector<16x128xf32>
    %97 = arith.mulf %89, %96 : vector<16x128xf32>
    %cst_43 = arith.constant dense<0.000000e+00> : vector<16xf32>
    %98 = vector.multi_reduction <add>, %97, %cst_43 [1] : vector<16x128xf32> to vector<16xf32>
    %99 = vector.shape_cast %98 : vector<16xf32> to vector<16x1xf32>
    %100 = tpu.concatenate %94, %99 in 1 : vector<16x1xf32>, vector<16x1xf32> -> vector<16x2xf32>
    %c0_44 = arith.constant 0 : index
    %c0_45 = arith.constant 0 : index
    %101 = vector.load %arg7[%c0_44, %c0_45] : memref<1x2xf32, #tpu.memory_space<vmem>>, vector<1x2xf32>
    %102 = vector.broadcast %101 : vector<1x2xf32> to vector<16x2xf32>
    %103 = arith.addf %100, %102 : vector<16x2xf32>
    %c0_46 = arith.constant 0 : index
    %c0_47 = arith.constant 0 : index
    %104 = vector.load %arg8[%c0_46, %c0_47] : memref<16x2xf32, #tpu.memory_space<vmem>>, vector<16x2xf32>
    tpu.vector_store %arg8[%c0_46, %c0_47], %103 {strides = array<i32>} : memref<16x2xf32, #tpu.memory_space<vmem>>, vector<16x2xf32>,
    return
  }
  func.func @transform_0(%arg0: i32) -> (i32, i32) {
    %c0_i32 = arith.constant 0 : i32
    %c0_i32_0 = arith.constant 0 : i32
    return %arg0, %c0_i32 : i32, i32
  }
  func.func @transform_1(%arg0: i32) -> (i32, i32) {
    %c0_i32 = arith.constant 0 : i32
    %c0_i32_0 = arith.constant 0 : i32
    return %arg0, %c0_i32 : i32, i32
  }
  func.func @transform_2(%arg0: i32) -> (i32, i32) {
    %c0_i32 = arith.constant 0 : i32
    %c0_i32_0 = arith.constant 0 : i32
    %c0_i32_1 = arith.constant 0 : i32
    return %c0_i32, %c0_i32_0 : i32, i32
  }
  func.func @transform_3(%arg0: i32) -> (i32, i32, i32) {
    %c0_i32 = arith.constant 0 : i32
    %c0_i32_0 = arith.constant 0 : i32
    %c0_i32_1 = arith.constant 0 : i32
    %c0_i32_2 = arith.constant 0 : i32
    return %c0_i32, %c0_i32_0, %c0_i32_1 : i32, i32, i32
  }
  func.func @transform_4(%arg0: i32) -> (i32, i32) {
    %c0_i32 = arith.constant 0 : i32
    %c0_i32_0 = arith.constant 0 : i32
    %c0_i32_1 = arith.constant 0 : i32
    return %c0_i32, %c0_i32_0 : i32, i32
  }
  func.func @transform_5(%arg0: i32) -> (i32, i32) {
    %c0_i32 = arith.constant 0 : i32
    %c0_i32_0 = arith.constant 0 : i32
    %c0_i32_1 = arith.constant 0 : i32
    return %c0_i32, %c0_i32_0 : i32, i32
  }
  func.func @transform_6(%arg0: i32) -> (i32, i32) {
    %c0_i32 = arith.constant 0 : i32
    %c0_i32_0 = arith.constant 0 : i32
    %c0_i32_1 = arith.constant 0 : i32
    return %c0_i32, %c0_i32_0 : i32, i32
  }
  func.func @transform_7(%arg0: i32) -> (i32, i32) {
    %c0_i32 = arith.constant 0 : i32
    %c0_i32_0 = arith.constant 0 : i32
    return %arg0, %c0_i32 : i32, i32
  }
}

</mosaic_0001>

<llo_original>
// kernel: base_model_forward.1
$region0: #{base_model_forward.1}
  #allocation0 [shape = 'u32[]', space=smem, size = 0x4, offset = 0x4, fixed_abs, tag = 'smem constant byte address 0x4 - core index']
  #allocation1 [shape = 'u32[144,128]{1,0:T(1,128)}', space=vmem, size = 0x12000, scoped, tag = 'internal scratch']
  %s0 = inlined_call_operand.vmem [shape: f32[16,2], index: 0, kind: input, shape index: {}]
  %s1 = inlined_call_operand.vmem [shape: f32[16,128], index: 1, kind: input, shape index: {}]
  %s2 = inlined_call_operand.vmem [shape: f32[2,128], index: 2, kind: input, shape index: {}]
  %s3 = inlined_call_operand.vmem [shape: bf16[5,128,128], index: 3, kind: input, shape index: {}]
  %s4 = inlined_call_operand.vmem [shape: f32[5,128], index: 4, kind: input, shape index: {}]
  %s5 = inlined_call_operand.vmem [shape: f32[2,128], index: 5, kind: input, shape index: {}]
  %s6 = inlined_call_operand.vmem [shape: f32[1,2], index: 6, kind: input, shape index: {}]
  %s7 = inlined_call_operand.vmem [shape: f32[16,2], index: 7, kind: output, shape index: {}]
  %s8 = sld [smem:[#allocation0]]
  $region38: #{base_model_forward.1} parent=0
    _
  %s10 = ssub.s32 1, %s8
  %s11 = scalar_select 0, %s10, %s8
  // Predicated region
  $region2: #{base_model_forward.1} parent=0 // pred_check
    _
  $region3: #{base_model_forward.1} parent=0 // pred_check_branch
    %13 = sbr.rel (0) target = $region5
  $region4: #{base_model_forward.1} parent=0 // pred_region
    _
  $region5: #{base_model_forward.1} parent=0 // pred_fallthru
    _
  // Predicated region
  $region6: #{base_model_forward.1} parent=0 // pred_check
    _
  $region7: #{base_model_forward.1} parent=0 // pred_check_branch
    %15 = sbr.rel (0) target = $region9
  $region8: #{base_model_forward.1} parent=0 // pred_region
    _
  $region9: #{base_model_forward.1} parent=0 // pred_fallthru
    _
  // Predicated region
  $region10: #{base_model_forward.1} parent=0 // pred_check
    _
  $region11: #{base_model_forward.1} parent=0 // pred_check_branch
    %17 = sbr.rel (0) target = $region13
  $region12: #{base_model_forward.1} parent=0 // pred_region
    _
  $region13: #{base_model_forward.1} parent=0 // pred_fallthru
    _
  // Predicated region
  $region14: #{base_model_forward.1} parent=0 // pred_check
    _
  $region15: #{base_model_forward.1} parent=0 // pred_check_branch
    %19 = sbr.rel (0) target = $region17
  $region16: #{base_model_forward.1} parent=0 // pred_region
    _
  $region17: #{base_model_forward.1} parent=0 // pred_fallthru
    _
  // Predicated region
  $region18: #{base_model_forward.1} parent=0 // pred_check
    _
  $region19: #{base_model_forward.1} parent=0 // pred_check_branch
    %21 = sbr.rel (0) target = $region21
  $region20: #{base_model_forward.1} parent=0 // pred_region
    _
  $region21: #{base_model_forward.1} parent=0 // pred_fallthru
    _
  // Predicated region
  $region22: #{base_model_forward.1} parent=0 // pred_check
    _
  $region23: #{base_model_forward.1} parent=0 // pred_check_branch
    %23 = sbr.rel (0) target = $region25
  $region24: #{base_model_forward.1} parent=0 // pred_region
    _
  $region25: #{base_model_forward.1} parent=0 // pred_fallthru
    _
  // Predicated region
  $region26: #{base_model_forward.1} parent=0 // pred_check
    _
  $region27: #{base_model_forward.1} parent=0 // pred_check_branch
    %25 = sbr.rel (0) target = $region29
  $region28: #{base_model_forward.1} parent=0 // pred_region
    _
  $region29: #{base_model_forward.1} parent=0 // pred_fallthru
    _
  %v27 = vld [vmem:[%s0] sm:$0xff]
  %v28 = vld [vmem:[%s0 + $0x8] sm:$0xff]
  %v29 = vld [vmem:[%s2] sm:$0x1]
  %31 = vset.pattern.permute.xlu0 0
  %32 = vperm.xlu0 %31, %v27
  %v33 = vpop.permute.xlu0 %32
  %36 = vset.pattern.permute.xlu0 0
  %37 = vperm.xlu0 %36, %v28
  %v38 = vpop.permute.xlu0 %37
  %v40 = vlaneseq
  %v41 = vshrl.u32 %v40, 7
  %v42 = vsub.s32 0, %v41
  %v43 = vrot.slane %v29, %v42
  %v44 = vmul.f32 %v33, %v43
  %v45 = vmul.f32 %v38, %v43
  %v46 = vld [vmem:[%s2 + $0x1] sm:$0x1]
  %47 = vset.pattern.permute.xlu0 1
  %48 = vperm.xlu0 %47, %v27
  %v49 = vpop.permute.xlu0 %48
  %51 = vset.pattern.permute.xlu0 1
  %52 = vperm.xlu0 %51, %v28
  %v53 = vpop.permute.xlu0 %52
  %v55 = vlaneseq
  %v56 = vshrl.u32 %v55, 7
  %v57 = vsub.s32 0, %v56
  %v58 = vrot.slane %v46, %v57
  %v59 = vmul.f32 %v49, %v58
  %v60 = vmul.f32 %v53, %v58
  %v61 = vadd.f32 %v44, %v59
  %v62 = vadd.f32 %v45, %v60
  %v63 = vld [vmem:[%s1] sm:$0xff]
  %v64 = vld [vmem:[%s1 + $0x8] sm:$0xff]
  %v65 = vadd.f32 %v61, %v63
  %v66 = vadd.f32 %v62, %v64
  %v67 = vxor.u32 %v65, 2147483648
  %v68 = vxor.u32 %v66, 2147483648
  %v69 = vmul.f32 %v67, 1.442695
  %v70 = vpow.pop %v69
  %v71 = vmul.f32 %v68, 1.442695
  %v72 = vpow.pop %v71
  %v73 = vadd.f32 %v70, 1.0
  %v74 = vadd.f32 %v72, 1.0
  %v75 = vrcp.pop %v73
  %v76 = vmul.f32 1.0, %v75
  %v77 = vrcp.pop %v74
  %v78 = vmul.f32 1.0, %v77
  %v79 = vmul.f32 %v65, %v76
  %v80 = vmul.f32 %v66, %v78
  %v81 = vpack.c.bf16 %v80, %v79
  %v82 = vld [vmem:[%s3] sm:$0xf]
  %v83 = vld [vmem:[%s3 + $0x4] sm:$0xf]
  %v84 = vld [vmem:[%s3 + $0x8] sm:$0xf]
  %v85 = vld [vmem:[%s3 + $0xc] sm:$0xf]
  %v86 = vld [vmem:[%s3 + $0x10] sm:$0xf]
  %v87 = vld [vmem:[%s3 + $0x14] sm:$0xf]
  %v88 = vld [vmem:[%s3 + $0x18] sm:$0xf]
  %v89 = vld [vmem:[%s3 + $0x1c] sm:$0xf]
  %v90 = vld [vmem:[%s3 + $0x20] sm:$0xf]
  %v91 = vld [vmem:[%s3 + $0x24] sm:$0xf]
  %v92 = vld [vmem:[%s3 + $0x28] sm:$0xf]
  %v93 = vld [vmem:[%s3 + $0x2c] sm:$0xf]
  %v94 = vld [vmem:[%s3 + $0x30] sm:$0xf]
  %v95 = vld [vmem:[%s3 + $0x34] sm:$0xf]
  %v96 = vld [vmem:[%s3 + $0x38] sm:$0xf]
  %v97 = vld [vmem:[%s3 + $0x3c] sm:$0xf]
  %v98 = vld [vmem:[%s4] sm:$0x1]
  %v99 = vlaneseq
  %v100 = vshrl.u32 %v99, 7
  %v101 = vsub.s32 0, %v100
  %v102 = vrot.slane %v98, %v101
  %v119 = vunpack.c.l.b16 %v82
  %v120 = vunpack.c.l.b16 %v83
  %v121 = vunpack.c.l.b16 %v84
  %v122 = vunpack.c.l.b16 %v85
  %v123 = vunpack.c.l.b16 %v86
  %v124 = vunpack.c.l.b16 %v87
  %v125 = vunpack.c.l.b16 %v88
  %v126 = vunpack.c.l.b16 %v89
  %v127 = vunpack.c.l.b16 %v90
  %v128 = vunpack.c.l.b16 %v91
  %v129 = vunpack.c.l.b16 %v92
  %v130 = vunpack.c.l.b16 %v93
  %v131 = vunpack.c.l.b16 %v94
  %v132 = vunpack.c.l.b16 %v95
  %v133 = vunpack.c.l.b16 %v96
  %v134 = vunpack.c.l.b16 %v97
  %v135 = vpack.c.b16 %v120, %v119
  %v136 = vpack.c.b16 %v122, %v121
  %v137 = vpack.c.b16 %v124, %v123
  %v138 = vpack.c.b16 %v126, %v125
  %v139 = vpack.c.b16 %v128, %v127
  %v140 = vpack.c.b16 %v130, %v129
  %v141 = vpack.c.b16 %v132, %v131
  %v142 = vpack.c.b16 %v134, %v133
  %151 = vmatprep.subr.bf16.mxu0 0
  %152 = vmatpush1.bf16.msra.mxu0 %v135
  %153 = vmatprep.subr.bf16.mxu0 0
  %154 = vmatpush1.bf16.msra.mxu0 %v136
  %155 = vmatprep.subr.bf16.mxu0 0
  %156 = vmatpush1.bf16.msra.mxu0 %v137
  %157 = vmatprep.subr.bf16.mxu0 0
  %158 = vmatpush1.bf16.msra.mxu0 %v138
  %159 = vmatprep.subr.bf16.mxu0 0
  %160 = vmatpush1.bf16.msra.mxu0 %v139
  %161 = vmatprep.subr.bf16.mxu0 0
  %162 = vmatpush1.bf16.msra.mxu0 %v140
  %163 = vmatprep.subr.bf16.mxu0 0
  %164 = vmatpush1.bf16.msra.mxu0 %v141
  %165 = vmatprep.subr.bf16.mxu0 0
  %166 = vmatpush1.bf16.msra.mxu0 %v142
  %167 = vmatprep.subr.bf16.mxu0 0
  %168 = vmatpush1.bf16.msra.mxu0 0
  %169 = vmatprep.subr.bf16.mxu0 0
  %170 = vmatpush1.bf16.msra.mxu0 0
  %171 = vmatprep.subr.bf16.mxu0 0
  %172 = vmatpush1.bf16.msra.mxu0 0
  %173 = vmatprep.subr.bf16.mxu0 0
  %174 = vmatpush1.bf16.msra.mxu0 0
  %175 = vmatprep.subr.bf16.mxu0 0
  %176 = vmatpush1.bf16.msra.mxu0 0
  %177 = vmatprep.subr.bf16.mxu0 0
  %178 = vmatpush1.bf16.msra.mxu0 0
  %179 = vmatprep.subr.bf16.mxu0 0
  %180 = vmatpush1.bf16.msra.mxu0 0
  %181 = vmatprep.subr.bf16.mxu0 0
  %182 = vmatpush1.bf16.msra.mxu0 0
  %183 = vmatprep.mubr.bf16.mxu0 0
  %184 = vmatmul.mubr.bf16.gmra.mrb[0].mxu0 %v81
  %v185 = vpop.f32.mrb[0].mxu0
  %v186 = vadd.f32 %v102, %v185
  %v187 = vpop.f32.mrb[0].mxu0
  %v188 = vpop.f32.mrb[0].mxu0
  %v189 = vadd.f32 %v102, %v188
  %v190 = vpop.f32.mrb[0].mxu0
  %191 = vdwg.mxu0
  %v192 = vxor.u32 %v186, 2147483648
  %v193 = vxor.u32 %v189, 2147483648
  %v194 = vmul.f32 %v192, 1.442695
  %v195 = vpow.pop %v194
  %v196 = vmul.f32 %v193, 1.442695
  %v197 = vpow.pop %v196
  %v198 = vadd.f32 %v195, 1.0
  %v199 = vadd.f32 %v197, 1.0
  %v200 = vrcp.pop %v198
  %v201 = vmul.f32 1.0, %v200
  %v202 = vrcp.pop %v199
  %v203 = vmul.f32 1.0, %v202
  %v204 = vmul.f32 %v186, %v201
  %v205 = vmul.f32 %v189, %v203
  %v206 = vadd.f32 %v79, %v204
  %v207 = vadd.f32 %v80, %v205
  %v208 = vpack.c.bf16 %v207, %v206
  %s209 = scalar_lea.vmem %s3, 64
  %v210 = vld [vmem:[%s209] sm:$0xf]
  %v211 = vld [vmem:[%s209 + $0x4] sm:$0xf]
  %v212 = vld [vmem:[%s209 + $0x8] sm:$0xf]
  %v213 = vld [vmem:[%s209 + $0xc] sm:$0xf]
  %v214 = vld [vmem:[%s209 + $0x10] sm:$0xf]
  %v215 = vld [vmem:[%s209 + $0x14] sm:$0xf]
  %v216 = vld [vmem:[%s209 + $0x18] sm:$0xf]
  %v217 = vld [vmem:[%s209 + $0x1c] sm:$0xf]
  %v218 = vld [vmem:[%s209 + $0x20] sm:$0xf]
  %v219 = vld [vmem:[%s209 + $0x24] sm:$0xf]
  %v220 = vld [vmem:[%s209 + $0x28] sm:$0xf]
  %v221 = vld [vmem:[%s209 + $0x2c] sm:$0xf]
  %v222 = vld [vmem:[%s209 + $0x30] sm:$0xf]
  %v223 = vld [vmem:[%s209 + $0x34] sm:$0xf]
  %v224 = vld [vmem:[%s209 + $0x38] sm:$0xf]
  %v225 = vld [vmem:[%s209 + $0x3c] sm:$0xf]
  %v226 = vld [vmem:[%s4 + $0x1] sm:$0x1]
  %v227 = vlaneseq
  %v228 = vshrl.u32 %v227, 7
  %v229 = vsub.s32 0, %v228
  %v230 = vrot.slane %v226, %v229
  %v247 = vunpack.c.l.b16 %v210
  %v248 = vunpack.c.l.b16 %v211
  %v249 = vunpack.c.l.b16 %v212
  %v250 = vunpack.c.l.b16 %v213
  %v251 = vunpack.c.l.b16 %v214
  %v252 = vunpack.c.l.b16 %v215
  %v253 = vunpack.c.l.b16 %v216
  %v254 = vunpack.c.l.b16 %v217
  %v255 = vunpack.c.l.b16 %v218
  %v256 = vunpack.c.l.b16 %v219
  %v257 = vunpack.c.l.b16 %v220
  %v258 = vunpack.c.l.b16 %v221
  %v259 = vunpack.c.l.b16 %v222
  %v260 = vunpack.c.l.b16 %v223
  %v261 = vunpack.c.l.b16 %v224
  %v262 = vunpack.c.l.b16 %v225
  %v263 = vpack.c.b16 %v248, %v247
  %v264 = vpack.c.b16 %v250, %v249
  %v265 = vpack.c.b16 %v252, %v251
  %v266 = vpack.c.b16 %v254, %v253
  %v267 = vpack.c.b16 %v256, %v255
  %v268 = vpack.c.b16 %v258, %v257
  %v269 = vpack.c.b16 %v260, %v259
  %v270 = vpack.c.b16 %v262, %v261
  %279 = vmatprep.subr.bf16.mxu0 0
  %280 = vmatpush1.bf16.msra.mxu0 %v263
  %281 = vmatprep.subr.bf16.mxu0 0
  %282 = vmatpush1.bf16.msra.mxu0 %v264
  %283 = vmatprep.subr.bf16.mxu0 0
  %284 = vmatpush1.bf16.msra.mxu0 %v265
  %285 = vmatprep.subr.bf16.mxu0 0
  %286 = vmatpush1.bf16.msra.mxu0 %v266
  %287 = vmatprep.subr.bf16.mxu0 0
  %288 = vmatpush1.bf16.msra.mxu0 %v267
  %289 = vmatprep.subr.bf16.mxu0 0
  %290 = vmatpush1.bf16.msra.mxu0 %v268
  %291 = vmatprep.subr.bf16.mxu0 0
  %292 = vmatpush1.bf16.msra.mxu0 %v269
  %293 = vmatprep.subr.bf16.mxu0 0
  %294 = vmatpush1.bf16.msra.mxu0 %v270
  %295 = vmatprep.subr.bf16.mxu0 0
  %296 = vmatpush1.bf16.msra.mxu0 0
  %297 = vmatprep.subr.bf16.mxu0 0
  %298 = vmatpush1.bf16.msra.mxu0 0
  %299 = vmatprep.subr.bf16.mxu0 0
  %300 = vmatpush1.bf16.msra.mxu0 0
  %301 = vmatprep.subr.bf16.mxu0 0
  %302 = vmatpush1.bf16.msra.mxu0 0
  %303 = vmatprep.subr.bf16.mxu0 0
  %304 = vmatpush1.bf16.msra.mxu0 0
  %305 = vmatprep.subr.bf16.mxu0 0
  %306 = vmatpush1.bf16.msra.mxu0 0
  %307 = vmatprep.subr.bf16.mxu0 0
  %308 = vmatpush1.bf16.msra.mxu0 0
  %309 = vmatprep.subr.bf16.mxu0 0
  %310 = vmatpush1.bf16.msra.mxu0 0
  %311 = vmatprep.mubr.bf16.mxu0 0
  %312 = vmatmul.mubr.bf16.gmra.mrb[0].mxu0 %v208
  %v313 = vpop.f32.mrb[0].mxu0
  %v314 = vadd.f32 %v230, %v313
  %v315 = vpop.f32.mrb[0].mxu0
  %v316 = vpop.f32.mrb[0].mxu0
  %v317 = vadd.f32 %v230, %v316
  %v318 = vpop.f32.mrb[0].mxu0
  %319 = vdwg.mxu0
  %v320 = vxor.u32 %v314, 2147483648
  %v321 = vxor.u32 %v317, 2147483648
  %v322 = vmul.f32 %v320, 1.442695
  %v323 = vpow.pop %v322
  %v324 = vmul.f32 %v321, 1.442695
  %v325 = vpow.pop %v324
  %v326 = vadd.f32 %v323, 1.0
  %v327 = vadd.f32 %v325, 1.0
  %v328 = vrcp.pop %v326
  %v329 = vmul.f32 1.0, %v328
  %v330 = vrcp.pop %v327
  %v331 = vmul.f32 1.0, %v330
  %v332 = vmul.f32 %v314, %v329
  %v333 = vmul.f32 %v317, %v331
  %v334 = vadd.f32 %v206, %v332
  %v335 = vadd.f32 %v207, %v333
  %v336 = vpack.c.bf16 %v335, %v334
  %s337 = scalar_lea.vmem %s3, 128
  %v338 = vld [vmem:[%s337] sm:$0xf]
  %v339 = vld [vmem:[%s337 + $0x4] sm:$0xf]
  %v340 = vld [vmem:[%s337 + $0x8] sm:$0xf]
  %v341 = vld [vmem:[%s337 + $0xc] sm:$0xf]
  %v342 = vld [vmem:[%s337 + $0x10] sm:$0xf]
  %v343 = vld [vmem:[%s337 + $0x14] sm:$0xf]
  %v344 = vld [vmem:[%s337 + $0x18] sm:$0xf]
  %v345 = vld [vmem:[%s337 + $0x1c] sm:$0xf]
  %v346 = vld [vmem:[%s337 + $0x20] sm:$0xf]
  %v347 = vld [vmem:[%s337 + $0x24] sm:$0xf]
  %v348 = vld [vmem:[%s337 + $0x28] sm:$0xf]
  %v349 = vld [vmem:[%s337 + $0x2c] sm:$0xf]
  %v350 = vld [vmem:[%s337 + $0x30] sm:$0xf]
  %v351 = vld [vmem:[%s337 + $0x34] sm:$0xf]
  %v352 = vld [vmem:[%s337 + $0x38] sm:$0xf]
  %v353 = vld [vmem:[%s337 + $0x3c] sm:$0xf]
  %v354 = vld [vmem:[%s4 + $0x2] sm:$0x1]
  %v355 = vlaneseq
  %v356 = vshrl.u32 %v355, 7
  %v357 = vsub.s32 0, %v356
  %v358 = vrot.slane %v354, %v357
  %v375 = vunpack.c.l.b16 %v338
  %v376 = vunpack.c.l.b16 %v339
  %v377 = vunpack.c.l.b16 %v340
  %v378 = vunpack.c.l.b16 %v341
  %v379 = vunpack.c.l.b16 %v342
  %v380 = vunpack.c.l.b16 %v343
  %v381 = vunpack.c.l.b16 %v344
  %v382 = vunpack.c.l.b16 %v345
  %v383 = vunpack.c.l.b16 %v346
  %v384 = vunpack.c.l.b16 %v347
  %v385 = vunpack.c.l.b16 %v348
  %v386 = vunpack.c.l.b16 %v349
  %v387 = vunpack.c.l.b16 %v350
  %v388 = vunpack.c.l.b16 %v351
  %v389 = vunpack.c.l.b16 %v352
  %v390 = vunpack.c.l.b16 %v353
  %v391 = vpack.c.b16 %v376, %v375
  %v392 = vpack.c.b16 %v378, %v377
  %v393 = vpack.c.b16 %v380, %v379
  %v394 = vpack.c.b16 %v382, %v381
  %v395 = vpack.c.b16 %v384, %v383
  %v396 = vpack.c.b16 %v386, %v385
  %v397 = vpack.c.b16 %v388, %v387
  %v398 = vpack.c.b16 %v390, %v389
  %407 = vmatprep.subr.bf16.mxu0 0
  %408 = vmatpush1.bf16.msra.mxu0 %v391
  %409 = vmatprep.subr.bf16.mxu0 0
  %410 = vmatpush1.bf16.msra.mxu0 %v392
  %411 = vmatprep.subr.bf16.mxu0 0
  %412 = vmatpush1.bf16.msra.mxu0 %v393
  %413 = vmatprep.subr.bf16.mxu0 0
  %414 = vmatpush1.bf16.msra.mxu0 %v394
  %415 = vmatprep.subr.bf16.mxu0 0
  %416 = vmatpush1.bf16.msra.mxu0 %v395
  %417 = vmatprep.subr.bf16.mxu0 0
  %418 = vmatpush1.bf16.msra.mxu0 %v396
  %419 = vmatprep.subr.bf16.mxu0 0
  %420 = vmatpush1.bf16.msra.mxu0 %v397
  %421 = vmatprep.subr.bf16.mxu0 0
  %422 = vmatpush1.bf16.msra.mxu0 %v398
  %423 = vmatprep.subr.bf16.mxu0 0
  %424 = vmatpush1.bf16.msra.mxu0 0
  %425 = vmatprep.subr.bf16.mxu0 0
  %426 = vmatpush1.bf16.msra.mxu0 0
  %427 = vmatprep.subr.bf16.mxu0 0
  %428 = vmatpush1.bf16.msra.mxu0 0
  %429 = vmatprep.subr.bf16.mxu0 0
  %430 = vmatpush1.bf16.msra.mxu0 0
  %431 = vmatprep.subr.bf16.mxu0 0
  %432 = vmatpush1.bf16.msra.mxu0 0
  %433 = vmatprep.subr.bf16.mxu0 0
  %434 = vmatpush1.bf16.msra.mxu0 0
  %435 = vmatprep.subr.bf16.mxu0 0
  %436 = vmatpush1.bf16.msra.mxu0 0
  %437 = vmatprep.subr.bf16.mxu0 0
  %438 = vmatpush1.bf16.msra.mxu0 0
  %439 = vmatprep.mubr.bf16.mxu0 0
  %440 = vmatmul.mubr.bf16.gmra.mrb[0].mxu0 %v336
  %v441 = vpop.f32.mrb[0].mxu0
  %v442 = vadd.f32 %v358, %v441
  %v443 = vpop.f32.mrb[0].mxu0
  %v444 = vpop.f32.mrb[0].mxu0
  %v445 = vadd.f32 %v358, %v444
  %v446 = vpop.f32.mrb[0].mxu0
  %447 = vdwg.mxu0
  %v448 = vxor.u32 %v442, 2147483648
  %v449 = vxor.u32 %v445, 2147483648
  %v450 = vmul.f32 %v448, 1.442695
  %v451 = vpow.pop %v450
  %v452 = vmul.f32 %v449, 1.442695
  %v453 = vpow.pop %v452
  %v454 = vadd.f32 %v451, 1.0
  %v455 = vadd.f32 %v453, 1.0
  %v456 = vrcp.pop %v454
  %v457 = vmul.f32 1.0, %v456
  %v458 = vrcp.pop %v455
  %v459 = vmul.f32 1.0, %v458
  %v460 = vmul.f32 %v442, %v457
  %v461 = vmul.f32 %v445, %v459
  %v462 = vadd.f32 %v334, %v460
  %v463 = vadd.f32 %v335, %v461
  %v464 = vpack.c.bf16 %v463, %v462
  %s465 = scalar_lea.vmem %s3, 192
  %v466 = vld [vmem:[%s465] sm:$0xf]
  %v467 = vld [vmem:[%s465 + $0x4] sm:$0xf]
  %v468 = vld [vmem:[%s465 + $0x8] sm:$0xf]
  %v469 = vld [vmem:[%s465 + $0xc] sm:$0xf]
  %v470 = vld [vmem:[%s465 + $0x10] sm:$0xf]
  %v471 = vld [vmem:[%s465 + $0x14] sm:$0xf]
  %v472 = vld [vmem:[%s465 + $0x18] sm:$0xf]
  %v473 = vld [vmem:[%s465 + $0x1c] sm:$0xf]
  %v474 = vld [vmem:[%s465 + $0x20] sm:$0xf]
  %v475 = vld [vmem:[%s465 + $0x24] sm:$0xf]
  %v476 = vld [vmem:[%s465 + $0x28] sm:$0xf]
  %v477 = vld [vmem:[%s465 + $0x2c] sm:$0xf]
  %v478 = vld [vmem:[%s465 + $0x30] sm:$0xf]
  %v479 = vld [vmem:[%s465 + $0x34] sm:$0xf]
  %v480 = vld [vmem:[%s465 + $0x38] sm:$0xf]
  %v481 = vld [vmem:[%s465 + $0x3c] sm:$0xf]
  %v482 = vld [vmem:[%s4 + $0x3] sm:$0x1]
  %v483 = vlaneseq
  %v484 = vshrl.u32 %v483, 7
  %v485 = vsub.s32 0, %v484
  %v486 = vrot.slane %v482, %v485
  %v503 = vunpack.c.l.b16 %v466
  %v504 = vunpack.c.l.b16 %v467
  %v505 = vunpack.c.l.b16 %v468
  %v506 = vunpack.c.l.b16 %v469
  %v507 = vunpack.c.l.b16 %v470
  %v508 = vunpack.c.l.b16 %v471
  %v509 = vunpack.c.l.b16 %v472
  %v510 = vunpack.c.l.b16 %v473
  %v511 = vunpack.c.l.b16 %v474
  %v512 = vunpack.c.l.b16 %v475
  %v513 = vunpack.c.l.b16 %v476
  %v514 = vunpack.c.l.b16 %v477
  %v515 = vunpack.c.l.b16 %v478
  %v516 = vunpack.c.l.b16 %v479
  %v517 = vunpack.c.l.b16 %v480
  %v518 = vunpack.c.l.b16 %v481
  %v519 = vpack.c.b16 %v504, %v503
  %v520 = vpack.c.b16 %v506, %v505
  %v521 = vpack.c.b16 %v508, %v507
  %v522 = vpack.c.b16 %v510, %v509
  %v523 = vpack.c.b16 %v512, %v511
  %v524 = vpack.c.b16 %v514, %v513
  %v525 = vpack.c.b16 %v516, %v515
  %v526 = vpack.c.b16 %v518, %v517
  %535 = vmatprep.subr.bf16.mxu0 0
  %536 = vmatpush1.bf16.msra.mxu0 %v519
  %537 = vmatprep.subr.bf16.mxu0 0
  %538 = vmatpush1.bf16.msra.mxu0 %v520
  %539 = vmatprep.subr.bf16.mxu0 0
  %540 = vmatpush1.bf16.msra.mxu0 %v521
  %541 = vmatprep.subr.bf16.mxu0 0
  %542 = vmatpush1.bf16.msra.mxu0 %v522
  %543 = vmatprep.subr.bf16.mxu0 0
  %544 = vmatpush1.bf16.msra.mxu0 %v523
  %545 = vmatprep.subr.bf16.mxu0 0
  %546 = vmatpush1.bf16.msra.mxu0 %v524
  %547 = vmatprep.subr.bf16.mxu0 0
  %548 = vmatpush1.bf16.msra.mxu0 %v525
  %549 = vmatprep.subr.bf16.mxu0 0
  %550 = vmatpush1.bf16.msra.mxu0 %v526
  %551 = vmatprep.subr.bf16.mxu0 0
  %552 = vmatpush1.bf16.msra.mxu0 0
  %553 = vmatprep.subr.bf16.mxu0 0
  %554 = vmatpush1.bf16.msra.mxu0 0
  %555 = vmatprep.subr.bf16.mxu0 0
  %556 = vmatpush1.bf16.msra.mxu0 0
  %557 = vmatprep.subr.bf16.mxu0 0
  %558 = vmatpush1.bf16.msra.mxu0 0
  %559 = vmatprep.subr.bf16.mxu0 0
  %560 = vmatpush1.bf16.msra.mxu0 0
  %561 = vmatprep.subr.bf16.mxu0 0
  %562 = vmatpush1.bf16.msra.mxu0 0
  %563 = vmatprep.subr.bf16.mxu0 0
  %564 = vmatpush1.bf16.msra.mxu0 0
  %565 = vmatprep.subr.bf16.mxu0 0
  %566 = vmatpush1.bf16.msra.mxu0 0
  %567 = vmatprep.mubr.bf16.mxu0 0
  %568 = vmatmul.mubr.bf16.gmra.mrb[0].mxu0 %v464
  %v569 = vpop.f32.mrb[0].mxu0
  %v570 = vadd.f32 %v486, %v569
  %v571 = vpop.f32.mrb[0].mxu0
  %v572 = vpop.f32.mrb[0].mxu0
  %v573 = vadd.f32 %v486, %v572
  %v574 = vpop.f32.mrb[0].mxu0
  %575 = vdwg.mxu0
  %v576 = vxor.u32 %v570, 2147483648
  %v577 = vxor.u32 %v573, 2147483648
  %v578 = vmul.f32 %v576, 1.442695
  %v579 = vpow.pop %v578
  %v580 = vmul.f32 %v577, 1.442695
  %v581 = vpow.pop %v580
  %v582 = vadd.f32 %v579, 1.0
  %v583 = vadd.f32 %v581, 1.0
  %v584 = vrcp.pop %v582
  %v585 = vmul.f32 1.0, %v584
  %v586 = vrcp.pop %v583
  %v587 = vmul.f32 1.0, %v586
  %v588 = vmul.f32 %v570, %v585
  %v589 = vmul.f32 %v573, %v587
  %v590 = vadd.f32 %v462, %v588
  %v591 = vadd.f32 %v463, %v589
  %v592 = vpack.c.bf16 %v591, %v590
  %s593 = scalar_lea.vmem %s3, 256
  %v594 = vld [vmem:[%s593] sm:$0xf]
  %v595 = vld [vmem:[%s593 + $0x4] sm:$0xf]
  %v596 = vld [vmem:[%s593 + $0x8] sm:$0xf]
  %v597 = vld [vmem:[%s593 + $0xc] sm:$0xf]
  %v598 = vld [vmem:[%s593 + $0x10] sm:$0xf]
  %v599 = vld [vmem:[%s593 + $0x14] sm:$0xf]
  %v600 = vld [vmem:[%s593 + $0x18] sm:$0xf]
  %v601 = vld [vmem:[%s593 + $0x1c] sm:$0xf]
  %v602 = vld [vmem:[%s593 + $0x20] sm:$0xf]
  %v603 = vld [vmem:[%s593 + $0x24] sm:$0xf]
  %v604 = vld [vmem:[%s593 + $0x28] sm:$0xf]
  %v605 = vld [vmem:[%s593 + $0x2c] sm:$0xf]
  %v606 = vld [vmem:[%s593 + $0x30] sm:$0xf]
  %v607 = vld [vmem:[%s593 + $0x34] sm:$0xf]
  %v608 = vld [vmem:[%s593 + $0x38] sm:$0xf]
  %v609 = vld [vmem:[%s593 + $0x3c] sm:$0xf]
  %v610 = vld [vmem:[%s4 + $0x4] sm:$0x1]
  %v611 = vlaneseq
  %v612 = vshrl.u32 %v611, 7
  %v613 = vsub.s32 0, %v612
  %v614 = vrot.slane %v610, %v613
  %v631 = vunpack.c.l.b16 %v594
  %v632 = vunpack.c.l.b16 %v595
  %v633 = vunpack.c.l.b16 %v596
  %v634 = vunpack.c.l.b16 %v597
  %v635 = vunpack.c.l.b16 %v598
  %v636 = vunpack.c.l.b16 %v599
  %v637 = vunpack.c.l.b16 %v600
  %v638 = vunpack.c.l.b16 %v601
  %v639 = vunpack.c.l.b16 %v602
  %v640 = vunpack.c.l.b16 %v603
  %v641 = vunpack.c.l.b16 %v604
  %v642 = vunpack.c.l.b16 %v605
  %v643 = vunpack.c.l.b16 %v606
  %v644 = vunpack.c.l.b16 %v607
  %v645 = vunpack.c.l.b16 %v608
  %v646 = vunpack.c.l.b16 %v609
  %v647 = vpack.c.b16 %v632, %v631
  %v648 = vpack.c.b16 %v634, %v633
  %v649 = vpack.c.b16 %v636, %v635
  %v650 = vpack.c.b16 %v638, %v637
  %v651 = vpack.c.b16 %v640, %v639
  %v652 = vpack.c.b16 %v642, %v641
  %v653 = vpack.c.b16 %v644, %v643
  %v654 = vpack.c.b16 %v646, %v645
  %663 = vmatprep.subr.bf16.mxu0 0
  %664 = vmatpush1.bf16.msra.mxu0 %v647
  %665 = vmatprep.subr.bf16.mxu0 0
  %666 = vmatpush1.bf16.msra.mxu0 %v648
  %667 = vmatprep.subr.bf16.mxu0 0
  %668 = vmatpush1.bf16.msra.mxu0 %v649
  %669 = vmatprep.subr.bf16.mxu0 0
  %670 = vmatpush1.bf16.msra.mxu0 %v650
  %671 = vmatprep.subr.bf16.mxu0 0
  %672 = vmatpush1.bf16.msra.mxu0 %v651
  %673 = vmatprep.subr.bf16.mxu0 0
  %674 = vmatpush1.bf16.msra.mxu0 %v652
  %675 = vmatprep.subr.bf16.mxu0 0
  %676 = vmatpush1.bf16.msra.mxu0 %v653
  %677 = vmatprep.subr.bf16.mxu0 0
  %678 = vmatpush1.bf16.msra.mxu0 %v654
  %679 = vmatprep.subr.bf16.mxu0 0
  %680 = vmatpush1.bf16.msra.mxu0 0
  %681 = vmatprep.subr.bf16.mxu0 0
  %682 = vmatpush1.bf16.msra.mxu0 0
  %683 = vmatprep.subr.bf16.mxu0 0
  %684 = vmatpush1.bf16.msra.mxu0 0
  %685 = vmatprep.subr.bf16.mxu0 0
  %686 = vmatpush1.bf16.msra.mxu0 0
  %687 = vmatprep.subr.bf16.mxu0 0
  %688 = vmatpush1.bf16.msra.mxu0 0
  %689 = vmatprep.subr.bf16.mxu0 0
  %690 = vmatpush1.bf16.msra.mxu0 0
  %691 = vmatprep.subr.bf16.mxu0 0
  %692 = vmatpush1.bf16.msra.mxu0 0
  %693 = vmatprep.subr.bf16.mxu0 0
  %694 = vmatpush1.bf16.msra.mxu0 0
  %695 = vmatprep.mubr.bf16.mxu0 0
  %696 = vmatmul.mubr.bf16.gmra.mrb[0].mxu0 %v592
  %v697 = vpop.f32.mrb[0].mxu0
  %v698 = vadd.f32 %v614, %v697
  %v699 = vpop.f32.mrb[0].mxu0
  %v700 = vpop.f32.mrb[0].mxu0
  %v701 = vadd.f32 %v614, %v700
  %v702 = vpop.f32.mrb[0].mxu0
  %703 = vdwg.mxu0
  %v704 = vxor.u32 %v698, 2147483648
  %v705 = vxor.u32 %v701, 2147483648
  %v706 = vmul.f32 %v704, 1.442695
  %v707 = vpow.pop %v706
  %v708 = vmul.f32 %v705, 1.442695
  %v709 = vpow.pop %v708
  %v710 = vadd.f32 %v707, 1.0
  %v711 = vadd.f32 %v709, 1.0
  %v712 = vrcp.pop %v710
  %v713 = vmul.f32 1.0, %v712
  %v714 = vrcp.pop %v711
  %v715 = vmul.f32 1.0, %v714
  %v716 = vmul.f32 %v698, %v713
  %v717 = vmul.f32 %v701, %v715
  %v718 = vadd.f32 %v590, %v716
  %v719 = vadd.f32 %v591, %v717
  %v720 = vld [vmem:[%s5] sm:$0x1]
  %v721 = vlaneseq
  %v722 = vshrl.u32 %v721, 7
  %v723 = vsub.s32 0, %v722
  %v724 = vrot.slane %v720, %v723
  %v725 = vmul.f32 %v718, %v724
  %v726 = vmul.f32 %v719, %v724
  %727 = vadd.xlane.f32.xlu0 %v725
  %v728 = vpop.xlane.xlu0 %727
  %729 = vadd.xlane.f32.xlu0 %v726
  %v730 = vpop.xlane.xlu0 %729
  %v731 = vld [vmem:[%s5 + $0x1] sm:$0x1]
  %v732 = vlaneseq
  %v733 = vshrl.u32 %v732, 7
  %v734 = vsub.s32 0, %v733
  %v735 = vrot.slane %v731, %v734
  %v736 = vmul.f32 %v718, %v735
  %v737 = vmul.f32 %v719, %v735
  %738 = vadd.xlane.f32.xlu0 %v736
  %v739 = vpop.xlane.xlu0 %738
  %740 = vadd.xlane.f32.xlu0 %v737
  %v741 = vpop.xlane.xlu0 %740
  %vm742 = vcmask 7168
  %v743 = vsel %vm742, %v728, %v739
  %v744 = vsel %vm742, %v730, %v741
  %v745 = vld [vmem:[%s6] sm:$0x1]
  %v747 = vlaneseq
  %v748 = vshrl.u32 %v747, 7
  %v749 = vsub.s32 0, %v748
  %v750 = vrot.slane %v745, %v749
  %v752 = vadd.f32 %v743, %v750
  %v753 = vadd.f32 %v744, %v750
  %vm754 = vcmask 15360
  %755 = vst.msk [vmem:[%s7] sm:$0xff] %vm754, %v752
  %756 = vst.msk [vmem:[%s7 + $0x8] sm:$0xff] %vm754, %v753
  // Predicated region
  $region30: #{base_model_forward.1} parent=0 // pred_check
    _
  $region31: #{base_model_forward.1} parent=0 // pred_check_branch
    %758 = sbr.rel (0) target = $region33
  $region32: #{base_model_forward.1} parent=0 // pred_region
    _
  $region33: #{base_model_forward.1} parent=0 // pred_fallthru
    _
  // Predicated region
  $region34: #{base_model_forward.1} parent=0 // pred_check
    _
  $region35: #{base_model_forward.1} parent=0 // pred_check_branch
    %760 = sbr.rel (0) target = $region37
  $region36: #{base_model_forward.1} parent=0 // pred_region
    _
  $region37: #{base_model_forward.1} parent=0 // pred_fallthru
    _

</llo_original>
